<compile_context>
chip_gen: v7x
topology: tpu7x:2x2x1
jax: 0.10.0
libtpu: 0.0.40
codegen_flags: <defaults>
</compile_context>

<pallas_src>
import functools

import jax
import jax.numpy as jnp
from jax.experimental import pallas as pl
from jax.experimental.pallas import tpu as pltpu


def _round_up(n, m):
    return ((n + m - 1) // m) * m


def internal_kernel(scalars_ref, x_ref, w1t_ref, b1_ref, w2_ref, o_ref,
                    *, chunk_n, num_chunks):
    # x_ref   : (D, TILE_N)  features on sublanes, rows on lanes
    # w1t_ref : (H, F)  (= w1.T)
    # b1_ref  : (H, 1)
    # w2_ref  : (H, 1)  (output_size == 1)
    # scalars_ref (SMEM, shape (2,)): [b2, scale_weight]
    F = w1t_ref.shape[1]

    w1t = w1t_ref[...]            # (H, F)   tiny, kept in vregs
    b1 = b1_ref[...]              # (H, 1)
    w2 = w2_ref[...]              # (H, 1)
    b2 = scalars_ref[0]
    ws = scalars_ref[1]

    def compute(start):
        xf = x_ref[0:F, pl.ds(start, chunk_n)]        # (F, chunk) static sublane slice
        xl = x_ref[F:F + 1, pl.ds(start, chunk_n)]    # (1, chunk) last input feature

        # FC1 + ReLU on the MXU: (H, F) @ (F, chunk) -> (H, chunk)
        h = jnp.dot(w1t, xf, preferred_element_type=jnp.float32)
        h = jnp.maximum(h + b1, 0.0)

        # FC2 (output_size == 1): VPU broadcast-mul + sublane reduce (MXU stays
        # free for FC1; review: do not rewrite FC1 as a VPU outer product).
        y = jnp.sum(h * w2, axis=0, keepdims=True)     # (1, chunk)

        y = jax.nn.sigmoid(y + b2) + xl
        o_ref[:, pl.ds(start, chunk_n)] = (y * ws).astype(o_ref.dtype)

    if num_chunks == 1:
        compute(0)
    else:
        # Chunk the tile so the (H, chunk) f32 hidden activation bounds VMEM
        # even for very large lane tiles.
        @pl.loop(0, num_chunks)
        def _(c):
            compute(pl.multiple_of(c * chunk_n, 128))


def internal_forward(x, params, *, tile_n=32768, chunk_n=8192, min_grid_steps=8):
    """x: [B, T, input_size] float32.  Returns [B, T, 1] float32."""
    w1, b1, w2, b2, ws = params
    B, T, D = x.shape
    F = D - 1
    H = w1.shape[1]
    O = w2.shape[1]
    assert O == 1, "scale = nn.Linear(1, 1) requires output_size == 1"
    N = B * T
    n128 = _round_up(N, 128)      # lane-axis length after the (<=127 row) pad

    # ---- tile selection (review: 16K-64K rows/step, lane-dense) ----
    tile_n = _round_up(min(tile_n, N), 128)            # never exceeds n128
    if N >= min_grid_steps * 16384:
        # Keep >= min_grid_steps steps so ("parallel",) can shard across both
        # v7x TensorCores, without dropping below 16K rows/step.
        tile_n = min(tile_n, _round_up(pl.cdiv(N, min_grid_steps), 128))
    chunk_n = min(chunk_n, tile_n)
    if tile_n % chunk_n != 0 or chunk_n % 128 != 0:
        chunk_n = tile_n                               # fall back to one chunk
    num_chunks = tile_n // chunk_n
    grid = (pl.cdiv(n128, tile_n),)                    # ragged last tile is masked

    # ---- single relayout pass: pad (<=127 rows) folded into the transpose ----
    x2d = x.reshape(N, D).astype(jnp.float32)
    if n128 != N:
        x2d = jnp.pad(x2d, ((0, n128 - N), (0, 0)))
    xt = x2d.T                                         # (D, n128) rows-on-lanes

    w1t = jnp.asarray(w1, jnp.float32).T               # (H, F)
    b1c = jnp.asarray(b1, jnp.float32).reshape(H, 1)   # (H, 1)
    w2c = jnp.asarray(w2, jnp.float32).reshape(H, 1)   # (H, 1)
    scalars = jnp.stack(
        [jnp.asarray(b2, jnp.float32).reshape(()),
         jnp.asarray(ws, jnp.float32).reshape(())]
    )                                                  # (2,)

    kernel = functools.partial(internal_kernel, chunk_n=chunk_n,
                               num_chunks=num_chunks)

    out = pl.pallas_call(
        kernel,
        out_shape=jax.ShapeDtypeStruct((1, n128), jnp.float32),
        grid=grid,
        in_specs=[
            pl.BlockSpec(memory_space=pltpu.MemorySpace.SMEM),   # scalars
            pl.BlockSpec((D, tile_n), lambda i: (0, i)),         # x (D, N)
            pl.BlockSpec((H, F), lambda i: (0, 0)),              # w1.T
            pl.BlockSpec((H, 1), lambda i: (0, 0)),              # b1
            pl.BlockSpec((H, 1), lambda i: (0, 0)),              # w2
        ],
        out_specs=pl.BlockSpec((1, tile_n), lambda i: (0, i)),
        compiler_params=pltpu.CompilerParams(
            dimension_semantics=("parallel",),
            vmem_limit_bytes=32 * 1024 * 1024,
        ),
    )(scalars, xt, w1t, b1c, w2c)

    return out[0, :N].reshape(B, T, O)


def reference_forward(x, params):
    w1, b1, w2, b2, ws = params
    emb = jnp.maximum(x[:, :, :-1] @ w1 + b1, 0.0)
    emb = jax.nn.sigmoid(emb @ w2 + b2)
    emb = emb + x[:, :, -1:]
    return emb * ws[0, 0]


if __name__ == "__main__":
    # Shapes consistent with the module: input_size=5 -> FC1 sees 4 features,
    # hidden_size=32, output_size=1 (required: scale is nn.Linear(1, 1)).
    B, T, input_size, hidden_size, output_size = 2, 8, 5, 32, 1

    key = jax.random.PRNGKey(0)
    kx, k1, k2, k3, k4, k5, kx2 = jax.random.split(key, 7)

    F = input_size - 1
    # deterministic synthetic parameters (stored as [in, out] for y = x @ W + b)
    w1 = jax.random.normal(k1, (F, hidden_size), dtype=jnp.float32) * 0.1
    b1 = jax.random.normal(k2, (hidden_size,), dtype=jnp.float32) * 0.1
    w2 = jax.random.normal(k3, (hidden_size, output_size), dtype=jnp.float32) * 0.1
    b2 = jax.random.normal(k4, (output_size,), dtype=jnp.float32) * 0.1
    ws = jax.random.normal(k5, (1, 1), dtype=jnp.float32)  # scale weight, no bias
    params = (w1, b1, w2, b2, ws)

    # Primary small-shape check (grid = 1, single chunk, masked lane tail).
    x = jax.random.normal(kx, (B, T, input_size), dtype=jnp.float32)
    out = jax.block_until_ready(internal_forward(x, params))
    ref = reference_forward(x, params)
    assert out.shape == (B, T, output_size)
    assert jnp.allclose(out, ref, atol=1e-5, rtol=1e-5), "mismatch vs reference (small)"

    # Secondary check exercising the multi-step grid, the in-kernel chunk loop
    # and the ragged trailing tile (N = 300 rows, tile_n = 256, chunk_n = 128).
    B2, T2 = 3, 100
    x2 = jax.random.normal(kx2, (B2, T2, input_size), dtype=jnp.float32)
    out2 = jax.block_until_ready(internal_forward(x2, params, tile_n=256, chunk_n=128))
    ref2 = reference_forward(x2, params)
    assert out2.shape == (B2, T2, output_size)
    assert jnp.allclose(out2, ref2, atol=1e-5, rtol=1e-5), "mismatch vs reference (chunked)"

    print("KERNEL_OK")
</pallas_src>

<mosaic_0001>
module attributes {stable_mosaic.version = 11 : i64} {
  func.func @internal_kernel(%arg0: i32, %arg1: memref<2xf32, #tpu.memory_space<smem>>, %arg2: memref<5x128xf32, #tpu.memory_space<vmem>>, %arg3: memref<32x4xf32, #tpu.memory_space<vmem>>, %arg4: memref<32x1xf32, #tpu.memory_space<vmem>>, %arg5: memref<32x1xf32, #tpu.memory_space<vmem>>, %arg6: memref<1x128xf32, #tpu.memory_space<vmem>>) attributes {dimension_semantics = [#tpu.dimension_semantics<parallel>], iteration_bounds = array<i64: 1>, scalar_prefetch = 0 : i64, scratch_operands = 0 : i64, tpu.core_type = #tpu.core_type<tc>, window_params = [{transform_indices = @transform_0, window_bounds = array<i64: 2>}, {transform_indices = @transform_1, window_bounds = array<i64: 5, 128>}, {pipeline_mode = #tpu.pipeline_mode<synchronous>, transform_indices = @transform_2, window_bounds = array<i64: 32, 4>}, {pipeline_mode = #tpu.pipeline_mode<synchronous>, transform_indices = @transform_3, window_bounds = array<i64: 32, 1>}, {pipeline_mode = #tpu.pipeline_mode<synchronous>, transform_indices = @transform_4, window_bounds = array<i64: 32, 1>}, {transform_indices = @transform_5, window_bounds = array<i64: 1, 128>}]} {
    %c0 = arith.constant 0 : index
    %c0_0 = arith.constant 0 : index
    %0 = vector.load %arg3[%c0, %c0_0] : memref<32x4xf32, #tpu.memory_space<vmem>>, vector<32x4xf32>
    %c0_1 = arith.constant 0 : index
    %c0_2 = arith.constant 0 : index
    %1 = vector.load %arg4[%c0_1, %c0_2] : memref<32x1xf32, #tpu.memory_space<vmem>>, vector<32x1xf32>
    %c0_3 = arith.constant 0 : index
    %c0_4 = arith.constant 0 : index
    %2 = vector.load %arg5[%c0_3, %c0_4] : memref<32x1xf32, #tpu.memory_space<vmem>>, vector<32x1xf32>
    %c0_5 = arith.constant 0 : index
    %3 = memref.load %arg1[%c0_5] : memref<2xf32, #tpu.memory_space<smem>>
    %c1 = arith.constant 1 : index
    %4 = memref.load %arg1[%c1] : memref<2xf32, #tpu.memory_space<smem>>
    %c0_6 = arith.constant 0 : index
    %c0_7 = arith.constant 0 : index
    %5 = vector.load %arg2[%c0_6, %c0_7] : memref<5x128xf32, #tpu.memory_space<vmem>>, vector<4x128xf32>
    %c4 = arith.constant 4 : index
    %c0_8 = arith.constant 0 : index
    %6 = vector.load %arg2[%c4, %c0_8] : memref<5x128xf32, #tpu.memory_space<vmem>>, vector<1x128xf32>
    %cst = arith.constant dense<0.000000e+00> : vector<32x128xf32>
    %7 = tpu.matmul %0, %5, %cst {dimension_numbers = #tpu.dot_dimension_numbers<[1], [0], [0], [1], [0, 0, 1, 1], [], []>} : vector<32x4xf32>, vector<4x128xf32>, vector<32x128xf32> -> vector<32x128xf32>
    %8 = vector.broadcast %1 : vector<32x1xf32> to vector<32x128xf32>
    %9 = arith.addf %7, %8 : vector<32x128xf32>
    %cst_9 = arith.constant 0.000000e+00 : f32
    %10 = vector.broadcast %cst_9 : f32 to vector<32x128xf32>
    %11 = arith.maximumf %9, %10 : vector<32x128xf32>
    %12 = vector.broadcast %2 : vector<32x1xf32> to vector<32x128xf32>
    %13 = arith.mulf %11, %12 : vector<32x128xf32>
    %cst_10 = arith.constant dense<0.000000e+00> : vector<128xf32>
    %14 = vector.multi_reduction <add>, %13, %cst_10 [0] : vector<32x128xf32> to vector<128xf32>
    %15 = vector.shape_cast %14 : vector<128xf32> to vector<1x128xf32>
    %16 = vector.broadcast %3 : f32 to vector<1x128xf32>
    %17 = arith.addf %15, %16 : vector<1x128xf32>
    %18 = arith.negf %17 : vector<1x128xf32>
    %19 = math.exp %18 : vector<1x128xf32>
    %cst_11 = arith.constant 1.000000e+00 : f32
    %20 = vector.broadcast %cst_11 : f32 to vector<1x128xf32>
    %21 = arith.addf %20, %19 : vector<1x128xf32>
    %22 = arith.divf %20, %21 : vector<1x128xf32>
    %23 = arith.addf %22, %6 : vector<1x128xf32>
    %24 = vector.broadcast %4 : f32 to vector<1x128xf32>
    %25 = arith.mulf %23, %24 : vector<1x128xf32>
    %c0_12 = arith.constant 0 : index
    %c0_13 = arith.constant 0 : index
    %26 = vector.load %arg6[%c0_12, %c0_13] : memref<1x128xf32, #tpu.memory_space<vmem>>, vector<1x128xf32>
    tpu.vector_store %arg6[%c0_12, %c0_13], %25 {strides = array<i32>} : memref<1x128xf32, #tpu.memory_space<vmem>>, vector<1x128xf32>,
    return
  }
  func.func @transform_0(%arg0: i32) -> i32 {
    %c0_i32 = arith.constant 0 : i32
    %c0_i32_0 = arith.constant 0 : i32
    return %c0_i32 : i32
  }
  func.func @transform_1(%arg0: i32) -> (i32, i32) {
    %c0_i32 = arith.constant 0 : i32
    %c0_i32_0 = arith.constant 0 : i32
    return %c0_i32, %arg0 : i32, i32
  }
  func.func @transform_2(%arg0: i32) -> (i32, i32) {
    %c0_i32 = arith.constant 0 : i32
    %c0_i32_0 = arith.constant 0 : i32
    %c0_i32_1 = arith.constant 0 : i32
    return %c0_i32, %c0_i32_0 : i32, i32
  }
  func.func @transform_3(%arg0: i32) -> (i32, i32) {
    %c0_i32 = arith.constant 0 : i32
    %c0_i32_0 = arith.constant 0 : i32
    %c0_i32_1 = arith.constant 0 : i32
    return %c0_i32, %c0_i32_0 : i32, i32
  }
  func.func @transform_4(%arg0: i32) -> (i32, i32) {
    %c0_i32 = arith.constant 0 : i32
    %c0_i32_0 = arith.constant 0 : i32
    %c0_i32_1 = arith.constant 0 : i32
    return %c0_i32, %c0_i32_0 : i32, i32
  }
  func.func @transform_5(%arg0: i32) -> (i32, i32) {
    %c0_i32 = arith.constant 0 : i32
    %c0_i32_0 = arith.constant 0 : i32
    return %c0_i32, %arg0 : i32, i32
  }
}

</mosaic_0001>

<llo_original>
// kernel: tpu_custom_call.1
$region0: #{tpu_custom_call.1}
  #allocation0 [shape = 'u32[]', space=smem, size = 0x4, offset = 0x4, fixed_abs, tag = 'smem constant byte address 0x4 - core index']
  #allocation1 [shape = 'u32[144,128]{1,0:T(1,128)}', space=vmem, size = 0x12000, scoped, tag = 'internal scratch']
  %s0 = inlined_call_operand.vmem [shape: f32[2], index: 0, kind: input, shape index: {}]
  %s1 = inlined_call_operand.vmem [shape: f32[5,128], index: 1, kind: input, shape index: {}]
  %s2 = inlined_call_operand.vmem [shape: f32[32,4], index: 2, kind: input, shape index: {}]
  %s3 = inlined_call_operand.vmem [shape: f32[32,1], index: 3, kind: input, shape index: {}]
  %s4 = inlined_call_operand.vmem [shape: f32[32,1], index: 4, kind: input, shape index: {}]
  %s5 = inlined_call_operand.hbm [shape: f32[1,128], index: 5, kind: output, shape index: {}]
  %s6 = sld [smem:[#allocation0]]
  $region34: #{tpu_custom_call.1} parent=0
    _
  %s8 = ssub.s32 1, %s6
  %s9 = scalar_select 0, %s8, %s6
  $region1: #{tpu_custom_call.1} parent=0
    #allocation2 [shape = 'u8[512]{0}', space=smem, size = 0x200, scoped, tag = 'input window, operand 0, single buffered']
    #allocation3 [shape = 's32[1]{0}', space=sflag, size = 0x4, scoped, tag = 'scoped memory for tpu_custom_call.1']
    #allocation4 [shape = 's32[1]{0}', space=sflag, size = 0x4, scoped, tag = 'scoped memory for tpu_custom_call.1']
    #allocation5 [shape = 'u8[512]{0}', space=vmem, size = 0x400, scoped, tag = 'output window, operand 0, single buffered']
    %10 = vsyncpa [#allocation4], 0
    %11 = vsyncpa [#allocation3], 0
    // Predicated region
    $region2: #{tpu_custom_call.1} parent=1 // pred_check
      _
    $region3: #{tpu_custom_call.1} parent=1 // pred_check_branch
      %13 = sbr.rel (0) target = $region5
    $region4: #{tpu_custom_call.1} parent=1 // pred_region
      %s15 = ssub.s32 16, 16
      %16 = vsyncadd [#allocation4], %s15
      %s18 = sshll.u32 %s0, 4
      %s19 = int_to_ptr.vmem [resolvable:$true] %s18
      %21 = dma.vmem_to_smem %s19, 16, [#allocation2], [#allocation4]
    $region5: #{tpu_custom_call.1} parent=1 // pred_fallthru
      _
    // Predicated region
    $region6: #{tpu_custom_call.1} parent=1 // pred_check
      _
    $region7: #{tpu_custom_call.1} parent=1 // pred_check_branch
      %23 = sbr.rel (0) target = $region9
    $region8: #{tpu_custom_call.1} parent=1 // pred_region
      _
    $region9: #{tpu_custom_call.1} parent=1 // pred_fallthru
      _
    // Predicated region
    $region10: #{tpu_custom_call.1} parent=1 // pred_check
      _
    $region11: #{tpu_custom_call.1} parent=1 // pred_check_branch
      %25 = sbr.rel (0) target = $region13
    $region12: #{tpu_custom_call.1} parent=1 // pred_region
      _
    $region13: #{tpu_custom_call.1} parent=1 // pred_fallthru
      _
    // Predicated region
    $region14: #{tpu_custom_call.1} parent=1 // pred_check
      _
    $region15: #{tpu_custom_call.1} parent=1 // pred_check_branch
      %27 = sbr.rel (0) target = $region17
    $region16: #{tpu_custom_call.1} parent=1 // pred_region
      _
    $region17: #{tpu_custom_call.1} parent=1 // pred_fallthru
      _
    // Predicated region
    $region18: #{tpu_custom_call.1} parent=1 // pred_check
      _
    $region19: #{tpu_custom_call.1} parent=1 // pred_check_branch
      %29 = sbr.rel (0) target = $region21
    $region20: #{tpu_custom_call.1} parent=1 // pred_region
      _
    $region21: #{tpu_custom_call.1} parent=1 // pred_fallthru
      _
    // Predicated region
    $region22: #{tpu_custom_call.1} parent=1 // pred_check
      _
    $region23: #{tpu_custom_call.1} parent=1 // pred_check_branch
      %31 = sbr.rel (0) target = $region25
    $region24: #{tpu_custom_call.1} parent=1 // pred_region
      %32 = dma.done [#allocation4], 16
    $region25: #{tpu_custom_call.1} parent=1 // pred_fallthru
      _
    %33 = sfence
    %v34 = vld [vmem:[%s2] sm:$0xff]
    %v35 = vld [vmem:[%s2 + $0x8] sm:$0xff]
    %v36 = vld [vmem:[%s2 + $0x10] sm:$0xff]
    %v37 = vld [vmem:[%s2 + $0x18] sm:$0xff]
    %v38 = vld [vmem:[%s3] sm:$0xff]
    %v39 = vld [vmem:[%s3 + $0x8] sm:$0xff]
    %v40 = vld [vmem:[%s3 + $0x10] sm:$0xff]
    %v41 = vld [vmem:[%s3 + $0x18] sm:$0xff]
    %v42 = vld [vmem:[%s4] sm:$0xff]
    %v43 = vld [vmem:[%s4 + $0x8] sm:$0xff]
    %v44 = vld [vmem:[%s4 + $0x10] sm:$0xff]
    %v45 = vld [vmem:[%s4 + $0x18] sm:$0xff]
    %s46 = sld [smem:[#allocation2]]
    %s47 = sld [smem:[#allocation2 + $0x1]]
    %v48 = vld [vmem:[%s1] sm:$0xf]
    %v49 = vld [vmem:[%s1 + $0x4] sm:$0x1]
    %51 = vset.pattern.permute.xlu0 0
    %52 = vperm.xlu0 %51, %v38
    %v53 = vpop.permute.xlu0 %52
    %56 = vset.pattern.permute.xlu0 0
    %57 = vperm.xlu0 %56, %v39
    %v58 = vpop.permute.xlu0 %57
    %61 = vset.pattern.permute.xlu0 0
    %62 = vperm.xlu0 %61, %v40
    %v63 = vpop.permute.xlu0 %62
    %66 = vset.pattern.permute.xlu0 0
    %67 = vperm.xlu0 %66, %v41
    %v68 = vpop.permute.xlu0 %67
    %vm70 = vcmask 31744
    %v72 = vsel %vm70, %v34, 0
    %v75 = vsel %vm70, %v35, 0
    %v78 = vsel %vm70, %v36, 0
    %v81 = vsel %vm70, %v37, 0
    %vm83 = vcmask 1043456
    %v85 = vsel %vm83, %v48, 0
    %87 = vmatprep.subr.mxu0 0.0
    %88 = vmatpush1.msra.mxu0 %v85
    %89 = vmatprep.subr.mxu0 0.0
    %90 = vmatpush1.msra.mxu0 0.0
    %91 = vmatprep.subr.mxu0 0.0
    %92 = vmatpush1.msra.mxu0 0.0
    %93 = vmatprep.subr.mxu0 0.0
    %94 = vmatpush1.msra.mxu0 0.0
    %95 = vmatprep.subr.mxu0 0.0
    %96 = vmatpush1.msra.mxu0 0.0
    %97 = vmatprep.subr.mxu0 0.0
    %98 = vmatpush1.msra.mxu0 0.0
    %99 = vmatprep.subr.mxu0 0.0
    %100 = vmatpush1.msra.mxu0 0.0
    %101 = vmatprep.subr.mxu0 0.0
    %102 = vmatpush1.msra.mxu0 0.0
    %103 = vmatprep.subr.mxu0 0.0
    %104 = vmatpush1.msra.mxu0 0.0
    %105 = vmatprep.subr.mxu0 0.0
    %106 = vmatpush1.msra.mxu0 0.0
    %107 = vmatprep.subr.mxu0 0.0
    %108 = vmatpush1.msra.mxu0 0.0
    %109 = vmatprep.subr.mxu0 0.0
    %110 = vmatpush1.msra.mxu0 0.0
    %111 = vmatprep.subr.mxu0 0.0
    %112 = vmatpush1.msra.mxu0 0.0
    %113 = vmatprep.subr.mxu0 0.0
    %114 = vmatpush1.msra.mxu0 0.0
    %115 = vmatprep.subr.mxu0 0.0
    %116 = vmatpush1.msra.mxu0 0.0
    %117 = vmatprep.subr.mxu0 0.0
    %118 = vmatpush1.msra.mxu0 0.0
    %119 = vmatprep.subr.mxu0 0.0
    %120 = vmatpush1.msra.mxu0 0.0
    %121 = vmatprep.subr.mxu0 0.0
    %122 = vmatpush1.msra.mxu0 0.0
    %123 = vmatprep.subr.mxu0 0.0
    %124 = vmatpush1.msra.mxu0 0.0
    %125 = vmatprep.subr.mxu0 0.0
    %126 = vmatpush1.msra.mxu0 0.0
    %127 = vmatprep.subr.mxu0 0.0
    %128 = vmatpush1.msra.mxu0 0.0
    %129 = vmatprep.subr.mxu0 0.0
    %130 = vmatpush1.msra.mxu0 0.0
    %131 = vmatprep.subr.mxu0 0.0
    %132 = vmatpush1.msra.mxu0 0.0
    %133 = vmatprep.subr.mxu0 0.0
    %134 = vmatpush1.msra.mxu0 0.0
    %135 = vmatprep.subr.mxu0 0.0
    %136 = vmatpush1.msra.mxu0 0.0
    %137 = vmatprep.subr.mxu0 0.0
    %138 = vmatpush1.msra.mxu0 0.0
    %139 = vmatprep.subr.mxu0 0.0
    %140 = vmatpush1.msra.mxu0 0.0
    %141 = vmatprep.subr.mxu0 0.0
    %142 = vmatpush1.msra.mxu0 0.0
    %143 = vmatprep.subr.mxu0 0.0
    %144 = vmatpush1.msra.mxu0 0.0
    %145 = vmatprep.subr.mxu0 0.0
    %146 = vmatpush1.msra.mxu0 0.0
    %147 = vmatprep.subr.mxu0 0.0
    %148 = vmatpush1.msra.mxu0 0.0
    %149 = vmatprep.subr.mxu0 0.0
    %150 = vmatpush1.msra.mxu0 0.0
    %151 = vmatprep.mubr.f32.mxu0 0.0
    %152 = vmatmul.mubr.f32.gmra.mrb[0].mxu0 %v72
    %v153 = vpop.f32.mrb[0].mxu0
    %v154 = vadd.f32 %v53, %v153
    %v155 = vpop.f32.mrb[0].mxu0
    %156 = vmatprep.mubr.f32.mxu0 0.0
    %157 = vmatmul.mubr.f32.gmra.mrb[0].mxu0 %v75
    %v158 = vpop.f32.mrb[0].mxu0
    %v159 = vadd.f32 %v58, %v158
    %v160 = vpop.f32.mrb[0].mxu0
    %161 = vmatprep.mubr.f32.mxu0 0.0
    %162 = vmatmul.mubr.f32.gmra.mrb[0].mxu0 %v78
    %v163 = vpop.f32.mrb[0].mxu0
    %v164 = vadd.f32 %v63, %v163
    %v165 = vpop.f32.mrb[0].mxu0
    %166 = vmatprep.mubr.f32.mxu0 0.0
    %167 = vmatmul.mubr.f32.gmra.mrb[0].mxu0 %v81
    %v168 = vpop.f32.mrb[0].mxu0
    %v169 = vadd.f32 %v68, %v168
    %v170 = vpop.f32.mrb[0].mxu0
    %171 = vdwg.mxu0
    %v172 = vmax.f32 %v154, 0.0
    %v173 = vmax.f32 %v159, 0.0
    %v174 = vmax.f32 %v164, 0.0
    %v175 = vmax.f32 %v169, 0.0
    %177 = vset.pattern.permute.xlu0 0
    %178 = vperm.xlu0 %177, %v42
    %v179 = vpop.permute.xlu0 %178
    %182 = vset.pattern.permute.xlu0 0
    %183 = vperm.xlu0 %182, %v43
    %v184 = vpop.permute.xlu0 %183
    %187 = vset.pattern.permute.xlu0 0
    %188 = vperm.xlu0 %187, %v44
    %v189 = vpop.permute.xlu0 %188
    %192 = vset.pattern.permute.xlu0 0
    %193 = vperm.xlu0 %192, %v45
    %v194 = vpop.permute.xlu0 %193
    %v196 = vmul.f32 %v172, %v179
    %v197 = vmul.f32 %v173, %v184
    %v198 = vmul.f32 %v174, %v189
    %v199 = vmul.f32 %v175, %v194
    %v200 = vadd.f32 %v196, %v197
    %v201 = vadd.f32 %v200, %v198
    %v202 = vadd.f32 %v201, %v199
    %v203 = vrot.slane %v202, 4
    %v204 = vadd.f32 %v202, %v203
    %v205 = vrot.slane %v204, 2
    %v206 = vadd.f32 %v204, %v205
    %v207 = vrot.slane %v206, 1
    %v208 = vadd.f32 %v206, %v207
    %v209 = vstv %s46
    %v210 = vadd.f32 %v208, %v209
    %v211 = vxor.u32 %v210, 2147483648
    %v212 = vmul.f32 %v211, 1.442695
    %v213 = vpow.pop %v212
    %v214 = vadd.f32 %v213, 1.0
    %v215 = vrcp.pop %v214
    %v216 = vmul.f32 1.0, %v215
    %v217 = vadd.f32 %v216, %v49
    %v218 = vstv %s47
    %v219 = vmul.f32 %v217, %v218
    %220 = vst [vmem:[#allocation5] sm:$0x1] %v219
    // Predicated region
    $region26: #{tpu_custom_call.1} parent=1 // pred_check
      _
    $region27: #{tpu_custom_call.1} parent=1 // pred_check_branch
      %222 = sbr.rel (0) target = $region29
    $region28: #{tpu_custom_call.1} parent=1 // pred_region
      %s224 = ssub.s32 16, 16
      %225 = vsyncadd [#allocation3], %s224
      %s227 = sshll.u32 [#allocation5], 4
      %s228 = int_to_ptr.vmem [resolvable:$true] %s227
      %230 = dma.vmem_to_hbm [thread:$0]  %s228, 16, %s5, [#allocation3]
    $region29: #{tpu_custom_call.1} parent=1 // pred_fallthru
      _
    // Predicated region
    $region30: #{tpu_custom_call.1} parent=1 // pred_check
      _
    $region31: #{tpu_custom_call.1} parent=1 // pred_check_branch
      %232 = sbr.rel (0) target = $region33
    $region32: #{tpu_custom_call.1} parent=1 // pred_region
      %233 = dma.done [#allocation3], 16
    $region33: #{tpu_custom_call.1} parent=1 // pred_fallthru
      _
    %234 = vsyncpa [#allocation3], 1
    %235 = vsyncpa [#allocation4], 1

</llo_original>
